<compile_context>
chip_gen: v5e
topology: v5e:2x2
jax: 0.10.0
libtpu: 0.0.40
codegen_flags: <defaults>
</compile_context>

<pallas_src>
import functools

import jax
import jax.numpy as jnp
from jax.experimental import pallas as pl
from jax.experimental.pallas import tpu as pltpu

LANE = 128          # lane width
SUB = 8             # sublane width (accumulator row count)
MAX_TM = 4096       # max rows per grid step (4096*128*4B = 2 MiB per f32 input)
CHUNK = 512         # rows per in-kernel sub-chunk (temporaries ~256 KiB)
PAD_LOGIT = -1e4    # exp/sigmoid underflow to exactly 0 in f32 -> zero contribution
N_CORES = 2         # leading parallel grid axis (used by v7x megacore)


def _round_up(a, b):
    return -(-a // b) * b


def _dice_ce_kernel(pred_ref, tgt_ref, out_ref, acc_ref, *, n_rows, tm, chunk, gc):
    c = pl.program_id(0)          # core-split axis ("parallel")
    i = pl.program_id(1)          # row-block reduction axis ("arbitrary")

    @pl.when(i == 0)
    def _():
        acc_ref[...] = jnp.zeros_like(acc_ref)

    # Logical (unclamped) first row of this block.  The input index_map clamps
    # the DMA into bounds; this mask zeroes duplicated / out-of-range rows.
    base_row = (c * gc + i) * tm

    n_chunks = tm // chunk
    row_iota = jax.lax.broadcasted_iota(jnp.int32, (chunk, LANE), 0)  # hoisted

    for k in range(n_chunks):     # static, fully unrolled straight-line code
        r0 = k * chunk
        x = pred_ref[r0:r0 + chunk, :].astype(jnp.float32)
        y = tgt_ref[r0:r0 + chunk, :].astype(jnp.float32)

        valid = (base_row + r0 + row_iota) < n_rows
        x = jnp.where(valid, x, PAD_LOGIT)   # PAD_LOGIT rows contribute exactly 0
        y = jnp.where(valid, y, 0.0)

        # Shared transcendental: e = exp(-|x|) feeds both terms.
        e = jnp.exp(-jnp.abs(x))
        one_plus_e = 1.0 + e
        # Numerically stable BCE-with-logits: max(x,0) - x*y + log(1 + e)
        bce = jnp.maximum(x, 0.0) - x * y + jnp.log(one_plus_e)
        # sigmoid(x): x>=0 -> 1/(1+e), x<0 -> e/(1+e).  Exact divide (tolerance).
        p = jnp.where(x >= 0.0, 1.0, e) / one_plus_e

        def fold(v):
            # (chunk, 128) -> (chunk//8, 8, 128) -> sum leading axis: VPU adds only.
            return jnp.sum(v.reshape(chunk // SUB, SUB, LANE), axis=0)

        acc_ref[0] += fold(bce)
        acc_ref[1] += fold(p * y)
        acc_ref[2] += fold(p * p)
        acc_ref[3] += fold(y * y)

    @pl.when(i == pl.num_programs(1) - 1)
    def _():
        out_ref[0] = acc_ref[...]


def dice_ce_loss(pred, target):
    """Pallas TPU implementation of DiceCELoss.forward(pred, target)."""
    assert pred.shape == target.shape
    n = pred.size
    p_item = jnp.dtype(pred.dtype).itemsize
    t_item = jnp.dtype(target.dtype).itemsize

    pf = pred.reshape(-1)
    tf = target.reshape(-1)

    # Lane alignment.  Fast path (n % 128 == 0): no pad op at all, reshape is free.
    # Ragged tail: pad only to the next 128 multiple; padded logits use PAD_LOGIT
    # (target 0) so they contribute exactly zero to every accumulated sum.
    # TODO(synk): for very large ragged inputs, stream the tail as a separate tile
    # instead of re-materializing the whole flat array with jnp.pad.
    lane_pad = (-n) % LANE
    if lane_pad:
        pf = jnp.pad(pf, (0, lane_pad),
                     constant_values=jnp.asarray(PAD_LOGIT, pred.dtype))
        tf = jnp.pad(tf, (0, lane_pad))
    rows = (n + lane_pad) // LANE

    # Row tile: as large as practical to amortize per-step pipeline overhead.
    # Sub-32-bit dtypes pack 16/32 rows per sublane tile -> align those to 32.
    row_align = SUB if min(p_item, t_item) >= 4 else 32
    if rows >= CHUNK:
        tm = min(MAX_TM, _round_up(rows, CHUNK))
        chunk = CHUNK
    else:
        tm = _round_up(rows, row_align)
        chunk = tm

    pf = pf.reshape(rows, LANE)
    tf = tf.reshape(rows, LANE)

    g_total = pl.cdiv(rows, tm)        # total row blocks
    gc = pl.cdiv(g_total, N_CORES)     # row blocks per core

    def in_map(c, i):
        # Clamp so the DMA never targets a block fully outside the array; any
        # duplicated block is zeroed by the in-kernel row mask.
        return (jnp.minimum(c * gc + i, g_total - 1), 0)

    kernel = functools.partial(_dice_ce_kernel,
                               n_rows=rows, tm=tm, chunk=chunk, gc=gc)

    partials = pl.pallas_call(
        kernel,
        out_shape=jax.ShapeDtypeStruct((N_CORES, 4, SUB, LANE), jnp.float32),
        grid_spec=pltpu.PrefetchScalarGridSpec(
            num_scalar_prefetch=0,
            grid=(N_CORES, gc),
            in_specs=[
                pl.BlockSpec((tm, LANE), in_map),
                pl.BlockSpec((tm, LANE), in_map),
            ],
            # Lane-dense per-core partials; written once per core.
            out_specs=pl.BlockSpec((1, 4, SUB, LANE), lambda c, i: (c, 0, 0, 0)),
            # Fixed-size accumulator (16 KiB), independent of the row tile.
            scratch_shapes=[pltpu.VMEM((4, SUB, LANE), jnp.float32)],
        ),
        compiler_params=pltpu.CompilerParams(
            dimension_semantics=("parallel", "arbitrary"),
            vmem_limit_bytes=32 * 1024 * 1024),
        cost_estimate=pl.CostEstimate(
            flops=18 * n,
            transcendentals=2 * n,
            bytes_accessed=n * (p_item + t_item) + N_CORES * 4 * SUB * LANE * 4),
    )(pf, tf)

    # Tiny scalar epilogue in plain JAX.
    sums = jnp.sum(partials, axis=(0, 2, 3))   # [bce, p*y, p*p, y*y]
    ce = sums[0] / n
    dice = 2.0 * sums[1] / (sums[2] + sums[3] + 1e-6)
    return ce + (1.0 - dice)


def _reference(pred, target):
    x = pred.astype(jnp.float32)
    y = target.astype(jnp.float32)
    bce = jnp.mean(jnp.maximum(x, 0.0) - x * y + jnp.log1p(jnp.exp(-jnp.abs(x))))
    p = jax.nn.sigmoid(x)
    num = 2.0 * jnp.sum(p * y)
    denom = jnp.sum(p * p) + jnp.sum(y * y) + 1e-6
    return bce + (1.0 - num / denom)


if __name__ == "__main__":
    key = jax.random.PRNGKey(0)
    k1, k2 = jax.random.split(key)
    # Small segmentation-style logits/target pair (NCHW).
    pred = jax.random.normal(k1, (2, 4, 16, 16), dtype=jnp.float32)
    target = jax.random.bernoulli(k2, 0.5, (2, 4, 16, 16)).astype(jnp.float32)

    loss = dice_ce_loss(pred, target)
    jax.block_until_ready(loss)

    ref = _reference(pred, target)
    assert jnp.allclose(loss, ref, rtol=1e-5, atol=1e-5), (loss, ref)
    print("KERNEL_OK")
</pallas_src>

<mosaic_0001>
module attributes {stable_mosaic.version = 11 : i64} {
  func.func @_dice_ce_kernel(%arg0: i32, %arg1: i32, %arg2: memref<16x128xf32, #tpu.memory_space<vmem>>, %arg3: memref<16x128xf32, #tpu.memory_space<vmem>>, %arg4: memref<1x4x8x128xf32, #tpu.memory_space<vmem>>, %arg5: memref<4x8x128xf32, #tpu.memory_space<vmem>>) attributes {dimension_semantics = [#tpu.dimension_semantics<parallel>, #tpu.dimension_semantics<arbitrary>], iteration_bounds = array<i64: 2, 1>, scalar_prefetch = 0 : i64, scratch_operands = 1 : i64, tpu.core_type = #tpu.core_type<tc>, window_params = [{transform_indices = @transform_0, window_bounds = array<i64: 16, 128>}, {transform_indices = @transform_1, window_bounds = array<i64: 16, 128>}, {transform_indices = @transform_2, window_bounds = array<i64: 1, 4, 8, 128>}]} {
    %c0_i32 = arith.constant 0 : i32
    %0 = arith.cmpi eq, %arg1, %c0_i32 : i32
    %1 = arith.extui %0 : i1 to i32
    %c0_i32_0 = arith.constant 0 : i32
    %2 = arith.cmpi ne, %1, %c0_i32_0 : i32
    scf.if %2 {
      %cst_39 = arith.constant 0.000000e+00 : f32
      %73 = vector.broadcast %cst_39 : f32 to vector<4x8x128xf32>
      %c0_40 = arith.constant 0 : index
      %c0_41 = arith.constant 0 : index
      %c0_42 = arith.constant 0 : index
      %74 = vector.load %arg5[%c0_40, %c0_41, %c0_42] : memref<4x8x128xf32, #tpu.memory_space<vmem>>, vector<4x8x128xf32>
      tpu.vector_store %arg5[%c0_40, %c0_41, %c0_42], %73 {strides = array<i32>} : memref<4x8x128xf32, #tpu.memory_space<vmem>>, vector<4x8x128xf32>,
    } else {
    }
    %c1_i32 = arith.constant 1 : i32
    %3 = arith.muli %arg0, %c1_i32 : i32
    %4 = arith.addi %3, %arg1 : i32
    %c16_i32 = arith.constant 16 : i32
    %5 = arith.muli %4, %c16_i32 : i32
    %6 = tpu.iota {dimensions = array<i32: 0>} : vector<16x128xi32>
    %c0 = arith.constant 0 : index
    %c0_1 = arith.constant 0 : index
    %7 = vector.load %arg2[%c0, %c0_1] : memref<16x128xf32, #tpu.memory_space<vmem>>, vector<16x128xf32>
    %c0_2 = arith.constant 0 : index
    %c0_3 = arith.constant 0 : index
    %8 = vector.load %arg3[%c0_2, %c0_3] : memref<16x128xf32, #tpu.memory_space<vmem>>, vector<16x128xf32>
    %c0_i32_4 = arith.constant 0 : i32
    %9 = arith.addi %5, %c0_i32_4 : i32
    %10 = vector.broadcast %9 : i32 to vector<16x128xi32>
    %11 = arith.addi %10, %6 : vector<16x128xi32>
    %c16_i32_5 = arith.constant 16 : i32
    %12 = vector.broadcast %c16_i32_5 : i32 to vector<16x128xi32>
    %13 = arith.cmpi slt, %11, %12 : vector<16x128xi32>
    %cst = arith.constant -1.000000e+04 : f32
    %14 = vector.broadcast %cst : f32 to vector<16x128xf32>
    %15 = arith.select %13, %7, %14 : vector<16x128xi1>, vector<16x128xf32>
    %cst_6 = arith.constant 0.000000e+00 : f32
    %16 = vector.broadcast %cst_6 : f32 to vector<16x128xf32>
    %17 = arith.select %13, %8, %16 : vector<16x128xi1>, vector<16x128xf32>
    %18 = math.absf %15 : vector<16x128xf32>
    %cst_7 = arith.constant 0.000000e+00 : f32
    %19 = vector.broadcast %cst_7 : f32 to vector<16x128xf32>
    %20 = arith.subf %19, %18 : vector<16x128xf32>
    %21 = math.exp %20 : vector<16x128xf32>
    %cst_8 = arith.constant 1.000000e+00 : f32
    %22 = vector.broadcast %cst_8 : f32 to vector<16x128xf32>
    %23 = arith.addf %22, %21 : vector<16x128xf32>
    %cst_9 = arith.constant 0.000000e+00 : f32
    %24 = vector.broadcast %cst_9 : f32 to vector<16x128xf32>
    %25 = arith.maximumf %15, %24 : vector<16x128xf32>
    %26 = arith.mulf %15, %17 : vector<16x128xf32>
    %27 = arith.subf %25, %26 : vector<16x128xf32>
    %28 = math.log %23 : vector<16x128xf32>
    %29 = arith.addf %27, %28 : vector<16x128xf32>
    %cst_10 = arith.constant 0.000000e+00 : f32
    %30 = vector.broadcast %cst_10 : f32 to vector<16x128xf32>
    %31 = arith.cmpf oge, %15, %30 : vector<16x128xf32>
    %cst_11 = arith.constant 1.000000e+00 : f32
    %32 = vector.broadcast %cst_11 : f32 to vector<16x128xf32>
    %33 = arith.select %31, %32, %21 : vector<16x128xi1>, vector<16x128xf32>
    %34 = arith.divf %33, %23 : vector<16x128xf32>
    %c0_12 = arith.constant 0 : index
    %c0_13 = arith.constant 0 : index
    %c0_14 = arith.constant 0 : index
    %35 = vector.load %arg5[%c0_12, %c0_13, %c0_14] : memref<4x8x128xf32, #tpu.memory_space<vmem>>, vector<1x8x128xf32>
    %36 = vector.shape_cast %35 : vector<1x8x128xf32> to vector<8x128xf32>
    %37 = vector.shape_cast %29 : vector<16x128xf32> to vector<2x8x128xf32>
    %cst_15 = arith.constant dense<0.000000e+00> : vector<8x128xf32>
    %38 = vector.multi_reduction <add>, %37, %cst_15 [0] : vector<2x8x128xf32> to vector<8x128xf32>
    %39 = arith.addf %36, %38 : vector<8x128xf32>
    %c0_16 = arith.constant 0 : index
    %c0_17 = arith.constant 0 : index
    %c0_18 = arith.constant 0 : index
    %40 = vector.load %arg5[%c0_16, %c0_17, %c0_18] : memref<4x8x128xf32, #tpu.memory_space<vmem>>, vector<1x8x128xf32>
    %41 = vector.shape_cast %40 : vector<1x8x128xf32> to vector<8x128xf32>
    %42 = vector.shape_cast %39 : vector<8x128xf32> to vector<1x8x128xf32>
    tpu.vector_store %arg5[%c0_16, %c0_17, %c0_18], %42 {strides = array<i32>} : memref<4x8x128xf32, #tpu.memory_space<vmem>>, vector<1x8x128xf32>,
    %c1 = arith.constant 1 : index
    %c0_19 = arith.constant 0 : index
    %c0_20 = arith.constant 0 : index
    %43 = vector.load %arg5[%c1, %c0_19, %c0_20] : memref<4x8x128xf32, #tpu.memory_space<vmem>>, vector<1x8x128xf32>
    %44 = vector.shape_cast %43 : vector<1x8x128xf32> to vector<8x128xf32>
    %45 = arith.mulf %34, %17 : vector<16x128xf32>
    %46 = vector.shape_cast %45 : vector<16x128xf32> to vector<2x8x128xf32>
    %cst_21 = arith.constant dense<0.000000e+00> : vector<8x128xf32>
    %47 = vector.multi_reduction <add>, %46, %cst_21 [0] : vector<2x8x128xf32> to vector<8x128xf32>
    %48 = arith.addf %44, %47 : vector<8x128xf32>
    %c1_22 = arith.constant 1 : index
    %c0_23 = arith.constant 0 : index
    %c0_24 = arith.constant 0 : index
    %49 = vector.load %arg5[%c1_22, %c0_23, %c0_24] : memref<4x8x128xf32, #tpu.memory_space<vmem>>, vector<1x8x128xf32>
    %50 = vector.shape_cast %49 : vector<1x8x128xf32> to vector<8x128xf32>
    %51 = vector.shape_cast %48 : vector<8x128xf32> to vector<1x8x128xf32>
    tpu.vector_store %arg5[%c1_22, %c0_23, %c0_24], %51 {strides = array<i32>} : memref<4x8x128xf32, #tpu.memory_space<vmem>>, vector<1x8x128xf32>,
    %c2 = arith.constant 2 : index
    %c0_25 = arith.constant 0 : index
    %c0_26 = arith.constant 0 : index
    %52 = vector.load %arg5[%c2, %c0_25, %c0_26] : memref<4x8x128xf32, #tpu.memory_space<vmem>>, vector<1x8x128xf32>
    %53 = vector.shape_cast %52 : vector<1x8x128xf32> to vector<8x128xf32>
    %54 = arith.mulf %34, %34 : vector<16x128xf32>
    %55 = vector.shape_cast %54 : vector<16x128xf32> to vector<2x8x128xf32>
    %cst_27 = arith.constant dense<0.000000e+00> : vector<8x128xf32>
    %56 = vector.multi_reduction <add>, %55, %cst_27 [0] : vector<2x8x128xf32> to vector<8x128xf32>
    %57 = arith.addf %53, %56 : vector<8x128xf32>
    %c2_28 = arith.constant 2 : index
    %c0_29 = arith.constant 0 : index
    %c0_30 = arith.constant 0 : index
    %58 = vector.load %arg5[%c2_28, %c0_29, %c0_30] : memref<4x8x128xf32, #tpu.memory_space<vmem>>, vector<1x8x128xf32>
    %59 = vector.shape_cast %58 : vector<1x8x128xf32> to vector<8x128xf32>
    %60 = vector.shape_cast %57 : vector<8x128xf32> to vector<1x8x128xf32>
    tpu.vector_store %arg5[%c2_28, %c0_29, %c0_30], %60 {strides = array<i32>} : memref<4x8x128xf32, #tpu.memory_space<vmem>>, vector<1x8x128xf32>,
    %c3 = arith.constant 3 : index
    %c0_31 = arith.constant 0 : index
    %c0_32 = arith.constant 0 : index
    %61 = vector.load %arg5[%c3, %c0_31, %c0_32] : memref<4x8x128xf32, #tpu.memory_space<vmem>>, vector<1x8x128xf32>
    %62 = vector.shape_cast %61 : vector<1x8x128xf32> to vector<8x128xf32>
    %63 = arith.mulf %17, %17 : vector<16x128xf32>
    %64 = vector.shape_cast %63 : vector<16x128xf32> to vector<2x8x128xf32>
    %cst_33 = arith.constant dense<0.000000e+00> : vector<8x128xf32>
    %65 = vector.multi_reduction <add>, %64, %cst_33 [0] : vector<2x8x128xf32> to vector<8x128xf32>
    %66 = arith.addf %62, %65 : vector<8x128xf32>
    %c3_34 = arith.constant 3 : index
    %c0_35 = arith.constant 0 : index
    %c0_36 = arith.constant 0 : index
    %67 = vector.load %arg5[%c3_34, %c0_35, %c0_36] : memref<4x8x128xf32, #tpu.memory_space<vmem>>, vector<1x8x128xf32>
    %68 = vector.shape_cast %67 : vector<1x8x128xf32> to vector<8x128xf32>
    %69 = vector.shape_cast %66 : vector<8x128xf32> to vector<1x8x128xf32>
    tpu.vector_store %arg5[%c3_34, %c0_35, %c0_36], %69 {strides = array<i32>} : memref<4x8x128xf32, #tpu.memory_space<vmem>>, vector<1x8x128xf32>,
    %c0_i32_37 = arith.constant 0 : i32
    %70 = arith.cmpi eq, %arg1, %c0_i32_37 : i32
    %71 = arith.extui %70 : i1 to i32
    %c0_i32_38 = arith.constant 0 : i32
    %72 = arith.cmpi ne, %71, %c0_i32_38 : i32
    scf.if %72 {
      %c0_39 = arith.constant 0 : index
      %c0_40 = arith.constant 0 : index
      %c0_41 = arith.constant 0 : index
      %73 = vector.load %arg5[%c0_39, %c0_40, %c0_41] : memref<4x8x128xf32, #tpu.memory_space<vmem>>, vector<4x8x128xf32>
      %c0_42 = arith.constant 0 : index
      %c0_43 = arith.constant 0 : index
      %c0_44 = arith.constant 0 : index
      %c0_45 = arith.constant 0 : index
      %74 = vector.load %arg4[%c0_42, %c0_43, %c0_44, %c0_45] : memref<1x4x8x128xf32, #tpu.memory_space<vmem>>, vector<1x4x8x128xf32>
      %75 = vector.shape_cast %74 : vector<1x4x8x128xf32> to vector<4x8x128xf32>
      %76 = vector.shape_cast %73 : vector<4x8x128xf32> to vector<1x4x8x128xf32>
      tpu.vector_store %arg4[%c0_42, %c0_43, %c0_44, %c0_45], %76 {strides = array<i32>} : memref<1x4x8x128xf32, #tpu.memory_space<vmem>>, vector<1x4x8x128xf32>,
    } else {
    }
    return
  }
  func.func @transform_0(%arg0: i32, %arg1: i32) -> (i32, i32) {
    %c1_i32 = arith.constant 1 : i32
    %0 = arith.muli %arg0, %c1_i32 : i32
    %1 = arith.addi %0, %arg1 : i32
    %c0_i32 = arith.constant 0 : i32
    %2 = arith.minsi %1, %c0_i32 : i32
    %c0_i32_0 = arith.constant 0 : i32
    %c0_i32_1 = arith.constant 0 : i32
    return %2, %c0_i32_0 : i32, i32
  }
  func.func @transform_1(%arg0: i32, %arg1: i32) -> (i32, i32) {
    %c1_i32 = arith.constant 1 : i32
    %0 = arith.muli %arg0, %c1_i32 : i32
    %1 = arith.addi %0, %arg1 : i32
    %c0_i32 = arith.constant 0 : i32
    %2 = arith.minsi %1, %c0_i32 : i32
    %c0_i32_0 = arith.constant 0 : i32
    %c0_i32_1 = arith.constant 0 : i32
    return %2, %c0_i32_0 : i32, i32
  }
  func.func @transform_2(%arg0: i32, %arg1: i32) -> (i32, i32, i32, i32) {
    %c0_i32 = arith.constant 0 : i32
    %c0_i32_0 = arith.constant 0 : i32
    %c0_i32_1 = arith.constant 0 : i32
    %c0_i32_2 = arith.constant 0 : i32
    return %arg0, %c0_i32, %c0_i32_0, %c0_i32_1 : i32, i32, i32, i32
  }
}

</mosaic_0001>

<llo_original>
// kernel: tpu_custom_call.1
$region0: #{tpu_custom_call.1}
  #allocation0 [shape = 'u32[]', space=smem, size = 0x4, offset = 0x4, fixed_abs, tag = 'smem constant byte address 0x4 - core index']
  #allocation1 [shape = 'u32[72,128]{1,0:T(1,128)}', space=vmem, size = 0x9000, scoped, tag = 'internal scratch']
  #allocation2 [shape = 'f32[4,8,128]{2,1,0:T(8,128)}', space=vmem, size = 0x4000, scoped, tag = 'scratch operand']
  %s0 = inlined_call_operand.hbm [shape: f32[16,128], index: 0, kind: input, shape index: {}]
  %s1 = inlined_call_operand.hbm [shape: f32[16,128], index: 1, kind: input, shape index: {}]
  %s2 = inlined_call_operand.hbm [shape: f32[2,4,8,128], index: 2, kind: output, shape index: {}]
  %s3 = sld [smem:[#allocation0]]
  $region57: #{tpu_custom_call.1} parent=0
    _
  %s5 = ssub.s32 1, %s3
  %s6 = scalar_select 0, %s5, %s3
  $region1: #{tpu_custom_call.1} parent=0
    #allocation3 [shape = 'u8[16384]{0}', space=vmem, size = 0x4000, scoped, tag = 'input window, operand 0']
    #allocation4 [shape = 's32[2]{0}', space=sflag, size = 0x8, scoped, tag = 'scoped memory for tpu_custom_call.1']
    #allocation5 [shape = 's32[2]{0}', space=sflag, size = 0x8, scoped, tag = 'scoped memory for tpu_custom_call.1']
    #allocation6 [shape = 'u8[16384]{0}', space=vmem, size = 0x4000, scoped, tag = 'input window, operand 1']
    #allocation7 [shape = 's32[2]{0}', space=sflag, size = 0x8, scoped, tag = 'scoped memory for tpu_custom_call.1']
    #allocation8 [shape = 'u8[32768]{0}', space=vmem, size = 0x8000, scoped, tag = 'output window, operand 0']
    %7 = vsyncpa [#allocation4], 0
    %s8 = scalar_lea.sflag [#allocation4], 1
    %9 = vsyncpa %s8, 0
    %10 = vsyncpa [#allocation7], 0
    %s11 = scalar_lea.sflag [#allocation7], 1
    %12 = vsyncpa %s11, 0
    %13 = vsyncpa [#allocation5], 0
    %s14 = scalar_lea.sflag [#allocation5], 1
    %15 = vsyncpa %s14, 0
    loop: start=0, step=1, limit=4
    $region2: #{tpu_custom_call.1} parent=1 // loop_pre_header
      _
    $region3: #{tpu_custom_call.1} parent=1 // loop_header
      %s17 = sphi 0, %s21
      %p18 = scmp.ge.s32.totalorder %s17, 4
      %s24 = sphi 0, %s36
      %s25 = sphi 0, %s32
      %s26 = sphi 0, %s24
      %s27 = sphi 0, %s25
      %s28 = sphi 0, %s26
      %s29 = sphi 0, %s27
      %s45 = sphi 0, %s47
      %s48 = sphi 0, %s45
      %s49 = sphi 0, %s48
      %s65 = sphi 0, %s49
      %s77 = sphi 0, %s79
      %s80 = sphi 0, %s77
      %s81 = sphi 0, %s80
      %s97 = sphi 0, %s81
      %s103 = sphi 0, %s105
      %s106 = sphi 0, %s103
      %s107 = sphi 0, %s106
      %s123 = sphi 0, %s107
    $region4: #{tpu_custom_call.1} parent=1 // loop_header_branch
      %20 = sbr.rel (%p18) target = $region8
    $region5: #{tpu_custom_call.1} parent=1 // loop_body
      %s22 = ssub.s32 %s17, 1
      %s23 = ssub.s32 %s17, 2
      %s30 = sadd.s32 1, %s25
      %p31 = scmp.ge.s32.totalorder %s30, 1
      %s32 = scalar_select %p31, 0, %s30
      %s33 = sadd.s32 1, %s24
      %s34 = scalar_select %p31, %s33, %s24
      %p35 = scmp.ge.s32.totalorder %s34, 2
      %s36 = scalar_select %p35, 0, %s34
      %s37 = sadd.s32 %s24, %s25
      %p38 = scmp.lt.s32.totalorder %s37, 0
      %s39 = scalar_select %p38, %s37, 0
      %s40 = sadd.s32 %s36, %s32
      %p41 = scmp.lt.s32.totalorder %s40, 0
      %s42 = scalar_select %p41, %s40, 0
      %s43 = ssub.s32 %s39, %s42
      %p44 = scmp.eq.s32.totalorder %s43, 0
      %s46 = sadd.s32 %s45, 1
      %s47 = scalar_select %p44, %s45, %s46
      %p50 = pneg %p44
      %p51 = scmp.eq.s32.totalorder %s17, 1
      %p52 = por %p50, %p51
      %p53 = scmp.ne.s32.totalorder %s45, %s48
      %p54 = scmp.eq.s32.totalorder %s17, 0
      %p55 = por %p53, %p54
      %p56 = scmp.ne.s32.totalorder %s45, %s48
      %p57 = scmp.eq.s32.totalorder %s22, 1
      %p58 = por %p56, %p57
      %p59 = scmp.ne.s32.totalorder %s48, %s49
      %p60 = scmp.eq.s32.totalorder %s22, 0
      %p61 = por %p59, %p60
      %p62 = scmp.ne.s32.totalorder %s48, %s49
      %p63 = scmp.eq.s32.totalorder %s23, 1
      %p64 = por %p62, %p63
      %p66 = scmp.ne.s32.totalorder %s49, %s65
      %p67 = scmp.eq.s32.totalorder %s23, 0
      %p68 = por %p66, %p67
      %s69 = sadd.s32 %s24, %s25
      %p70 = scmp.lt.s32.totalorder %s69, 0
      %s71 = scalar_select %p70, %s69, 0
      %s72 = sadd.s32 %s36, %s32
      %p73 = scmp.lt.s32.totalorder %s72, 0
      %s74 = scalar_select %p73, %s72, 0
      %s75 = ssub.s32 %s71, %s74
      %p76 = scmp.eq.s32.totalorder %s75, 0
      %s78 = sadd.s32 %s77, 1
      %s79 = scalar_select %p76, %s77, %s78
      %p82 = pneg %p76
      %p83 = scmp.eq.s32.totalorder %s17, 1
      %p84 = por %p82, %p83
      %p85 = scmp.ne.s32.totalorder %s77, %s80
      %p86 = scmp.eq.s32.totalorder %s17, 0
      %p87 = por %p85, %p86
      %p88 = scmp.ne.s32.totalorder %s77, %s80
      %p89 = scmp.eq.s32.totalorder %s22, 1
      %p90 = por %p88, %p89
      %p91 = scmp.ne.s32.totalorder %s80, %s81
      %p92 = scmp.eq.s32.totalorder %s22, 0
      %p93 = por %p91, %p92
      %p94 = scmp.ne.s32.totalorder %s80, %s81
      %p95 = scmp.eq.s32.totalorder %s23, 1
      %p96 = por %p94, %p95
      %p98 = scmp.ne.s32.totalorder %s81, %s97
      %p99 = scmp.eq.s32.totalorder %s23, 0
      %p100 = por %p98, %p99
      %s101 = ssub.s32 %s24, %s36
      %p102 = scmp.eq.s32.totalorder %s101, 0
      %s104 = sadd.s32 %s103, 1
      %s105 = scalar_select %p102, %s103, %s104
      %p108 = pneg %p102
      %p109 = scmp.eq.s32.totalorder %s17, 1
      %p110 = por %p108, %p109
      %p111 = scmp.ne.s32.totalorder %s103, %s106
      %p112 = scmp.eq.s32.totalorder %s17, 0
      %p113 = por %p111, %p112
      %p114 = scmp.ne.s32.totalorder %s103, %s106
      %p115 = scmp.eq.s32.totalorder %s22, 1
      %p116 = por %p114, %p115
      %p117 = scmp.ne.s32.totalorder %s106, %s107
      %p118 = scmp.eq.s32.totalorder %s22, 0
      %p119 = por %p117, %p118
      %p120 = scmp.ne.s32.totalorder %s106, %s107
      %p121 = scmp.eq.s32.totalorder %s23, 1
      %p122 = por %p120, %p121
      %p124 = scmp.ne.s32.totalorder %s107, %s123
      %p125 = scmp.eq.s32.totalorder %s23, 0
      %p126 = por %p124, %p125
      %p127 = scmp.le.s32.totalorder 1, %s17
      %p128 = scmp.lt.s32.totalorder %s17, 3
      %p129 = pnand %p127, %p128
      %p130 = pneg %p129
      // Predicated region
      $region9: #{tpu_custom_call.1} parent=5 // pred_check
        _
      $region10: #{tpu_custom_call.1} parent=5 // pred_check_branch
        %132 = sbr.rel (%p129) target = $region12
      $region11: #{tpu_custom_call.1} parent=5 // pred_region
        %s133 = ssub.s32 %s17, 1
      $region12: #{tpu_custom_call.1} parent=5 // pred_fallthru
        _
      %p134 = scmp.lt.s32.totalorder %s17, 2
      // Predicated region
      $region13: #{tpu_custom_call.1} parent=5 // pred_check
        %p135 = pneg %p134
      $region14: #{tpu_custom_call.1} parent=5 // pred_check_branch
        %137 = sbr.rel (%p135) target = $region16
      $region15: #{tpu_custom_call.1} parent=5 // pred_region
        // Predicated region
        $region17: #{tpu_custom_call.1} parent=15 // pred_check
          %p138 = pneg %p55
        $region18: #{tpu_custom_call.1} parent=15 // pred_check_branch
          %140 = sbr.rel (%p138) target = $region20
        $region19: #{tpu_custom_call.1} parent=15 // pred_region
          %s141 = sand.u32 %s45, 1
          %s142 = scalar_lea.sflag [#allocation4], %s141
          %s143 = sand.u32 %s45, 1
          %s144 = smul.addr %s143, 16
          %s145 = scalar_lea.vmem [#allocation3], %s144
          %s146 = sadd.s32 %s24, %s25
          %p147 = scmp.lt.s32.totalorder %s146, 0
          %s148 = scalar_select %p147, %s146, 0
          %s149 = smul.u32 2, %s148
          %151 = vsyncadd %s142, 0
          %s152 = smul.addr %s149, 8
          %s153 = scalar_lea.hbm %s0, %s152
          %s154 = sshll.u32 %s153, 4
          %s155 = int_to_ptr.hbm [resolvable:$true] %s154
          %s156 = sshll.u32 %s145, 4
          %s157 = int_to_ptr.vmem [resolvable:$true] %s156
          %162 = dma.hbm_to_vmem [thread:$0]  %s155, 256, %s157, %s142, 128, 128, 8
        $region20: #{tpu_custom_call.1} parent=15 // pred_fallthru
          _
        // Predicated region
        $region21: #{tpu_custom_call.1} parent=15 // pred_check
          %p163 = pneg %p87
        $region22: #{tpu_custom_call.1} parent=15 // pred_check_branch
          %165 = sbr.rel (%p163) target = $region24
        $region23: #{tpu_custom_call.1} parent=15 // pred_region
          %s166 = sand.u32 %s77, 1
          %s167 = scalar_lea.sflag [#allocation7], %s166
          %s168 = sand.u32 %s77, 1
          %s169 = smul.addr %s168, 16
          %s170 = scalar_lea.vmem [#allocation6], %s169
          %s171 = sadd.s32 %s24, %s25
          %p172 = scmp.lt.s32.totalorder %s171, 0
          %s173 = scalar_select %p172, %s171, 0
          %s174 = smul.u32 2, %s173
          %176 = vsyncadd %s167, 0
          %s177 = smul.addr %s174, 8
          %s178 = scalar_lea.hbm %s1, %s177
          %s179 = sshll.u32 %s178, 4
          %s180 = int_to_ptr.hbm [resolvable:$true] %s179
          %s181 = sshll.u32 %s170, 4
          %s182 = int_to_ptr.vmem [resolvable:$true] %s181
          %187 = dma.hbm_to_vmem [thread:$0]  %s180, 256, %s182, %s167, 128, 128, 8
        $region24: #{tpu_custom_call.1} parent=15 // pred_fallthru
          _
      $region16: #{tpu_custom_call.1} parent=5 // pred_fallthru
        _
      %p188 = scmp.le.s32.totalorder 1, %s17
      %p189 = scmp.lt.s32.totalorder %s17, 3
      %p190 = pnand %p188, %p189
      %p191 = pneg %p190
      // Predicated region
      $region25: #{tpu_custom_call.1} parent=5 // pred_check
        _
      $region26: #{tpu_custom_call.1} parent=5 // pred_check_branch
        %193 = sbr.rel (%p190) target = $region28
      $region27: #{tpu_custom_call.1} parent=5 // pred_region
        %s194 = ssub.s32 %s17, 1
        %s195 = sand.u32 %s48, 1
        %s196 = scalar_lea.sflag [#allocation4], %s195
        %s197 = sand.u32 %s48, 1
        %s198 = smul.addr %s197, 16
        %s199 = scalar_lea.vmem [#allocation3], %s198
        // Predicated region
        $region29: #{tpu_custom_call.1} parent=27 // pred_check
          %p200 = pneg %p61
        $region30: #{tpu_custom_call.1} parent=27 // pred_check_branch
          %202 = sbr.rel (%p200) target = $region32
        $region31: #{tpu_custom_call.1} parent=27 // pred_region
          %204 = dma.done %s196, 256
        $region32: #{tpu_custom_call.1} parent=27 // pred_fallthru
          _
        %s205 = sand.u32 %s80, 1
        %s206 = scalar_lea.sflag [#allocation7], %s205
        %s207 = sand.u32 %s80, 1
        %s208 = smul.addr %s207, 16
        %s209 = scalar_lea.vmem [#allocation6], %s208
        // Predicated region
        $region33: #{tpu_custom_call.1} parent=27 // pred_check
          %p210 = pneg %p93
        $region34: #{tpu_custom_call.1} parent=27 // pred_check_branch
          %212 = sbr.rel (%p210) target = $region36
        $region35: #{tpu_custom_call.1} parent=27 // pred_region
          %214 = dma.done %s206, 256
        $region36: #{tpu_custom_call.1} parent=27 // pred_fallthru
          _
        %s215 = sand.u32 %s48, 1
        %s216 = scalar_lea.sflag [#allocation4], %s215
        %s217 = sand.u32 %s48, 1
        %s218 = smul.addr %s217, 16
        %s219 = scalar_lea.vmem [#allocation3], %s218
        %p220 = pneg %p61
        %p221 = pneg %p58
        %s222 = sand.u32 %s80, 1
        %s223 = scalar_lea.sflag [#allocation7], %s222
        %s224 = sand.u32 %s80, 1
        %s225 = smul.addr %s224, 16
        %s226 = scalar_lea.vmem [#allocation6], %s225
        %p227 = pneg %p93
        %p228 = pneg %p90
        %p229 = pneg %p119
        %p230 = pneg %p116
        %s231 = sand.u32 %s106, 1
        %s232 = scalar_lea.sflag [#allocation5], %s231
        %s233 = sand.u32 %s106, 1
        %s234 = smul.addr %s233, 32
        %s235 = scalar_lea.vmem [#allocation8], %s234
        %s236 = sadd.s32 %s26, %s27
        %p237 = scmp.lt.s32.totalorder %s236, 0
        %s238 = scalar_select %p237, %s236, 0
        %s239 = smul.u32 2, %s238
        %s240 = sadd.s32 %s26, %s27
        %p241 = scmp.lt.s32.totalorder %s240, 0
        %s242 = scalar_select %p241, %s240, 0
        %s243 = smul.u32 2, %s242
        %p244 = scmp.eq.s32.totalorder %s27, 0
        // Predicated region
        $region37: #{tpu_custom_call.1} parent=27 // pred_check
          %p245 = pneg %p244
        $region38: #{tpu_custom_call.1} parent=27 // pred_check_branch
          %247 = sbr.rel (%p245) target = $region40
        $region39: #{tpu_custom_call.1} parent=27 // pred_region
          %248 = vst [vmem:[#allocation2] sm:$0xff] 0.0
          %249 = vst [vmem:[#allocation2 + $0x8] sm:$0xff] 0.0
          %250 = vst [vmem:[#allocation2 + $0x10] sm:$0xff] 0.0
          %251 = vst [vmem:[#allocation2 + $0x18] sm:$0xff] 0.0
        $region40: #{tpu_custom_call.1} parent=27 // pred_fallthru
          _
        %s252 = sadd.s32 %s26, %s27
        %s253 = smul.u32 %s252, 16
        %v254 = vlaneseq
        %v255 = vshrl.u32 %v254, 7
        %v256 = vadd.s32 %v255, 8
        %v257 = vld [vmem:[%s199] sm:$0xff]
        %v258 = vld [vmem:[%s199 + $0x8] sm:$0xff]
        %v259 = vld [vmem:[%s209] sm:$0xff]
        %v260 = vld [vmem:[%s209 + $0x8] sm:$0xff]
        %v261 = vstv %s253
        %v262 = vadd.s32 %v261, %v255
        %v263 = vadd.s32 %v261, %v256
        %vm264 = vcmp.lt.s32.totalorder %v262, 16
        %vm265 = vcmp.lt.s32.totalorder %v263, 16
        %v266 = vsel %vm264, %v257, -10000.0
        %v267 = vsel %vm265, %v258, -10000.0
        %v268 = vsel %vm264, %v259, 0.0
        %v269 = vsel %vm265, %v260, 0.0
        %v270 = vand.u32 2147483647, %v266
        %v271 = vand.u32 2147483647, %v267
        %v272 = vsub.f32 0.0, %v270
        %v273 = vsub.f32 0.0, %v271
        %v274 = vmul.f32 %v272, 1.442695
        %v275 = vpow.pop %v274
        %v276 = vmul.f32 %v273, 1.442695
        %v277 = vpow.pop %v276
        %v278 = vadd.f32 %v275, 1.0
        %v279 = vadd.f32 %v277, 1.0
        %v280 = vmax.f32 %v266, 0.0
        %v281 = vmax.f32 %v267, 0.0
        %v282 = vmul.f32 %v266, %v268
        %v283 = vmul.f32 %v267, %v269
        %v284 = vsub.f32 %v280, %v282
        %v285 = vsub.f32 %v281, %v283
        %v286 = vlog2.pop %v278
        %v287 = vmul.f32 %v286, 0.6931472
        %v288 = vlog2.pop %v279
        %v289 = vmul.f32 %v288, 0.6931472
        %v290 = vadd.f32 %v284, %v287
        %v291 = vadd.f32 %v285, %v289
        %vm292 = vcmp.ge.f32.partialorder %v266, 0.0
        %vm293 = vcmp.ge.f32.partialorder %v267, 0.0
        %v294 = vsel %vm292, 1.0, %v275
        %v295 = vsel %vm293, 1.0, %v277
        %v296 = vrcp.pop %v278
        %v297 = vmul.f32 %v278, %v296
        %v298 = vsub.f32 1.0, %v297
        %v299 = vmul.f32 %v296, %v298
        %v300 = vadd.f32 %v296, %v299
        %vm301 = vweird.f32 %v278
        %vm302 = vweird.f32 %v296
        %vm303 = vmor %vm301, %vm302
        %v304 = vsel %vm303, %v296, %v300
        %v305 = vand.u32 2147483647, %v278
        %vm306 = vcmp.eq.f32.partialorder %v305, 8.507059e+37
        %v307 = vand.u32 %v278, 2147483648
        %v308 = vor.u32 1.1754944e-38, %v307
        %v309 = vsel %vm306, %v308, %v304
        %v310 = vmul.f32 %v294, %v309
        %v311 = vrcp.pop %v279
        %v312 = vmul.f32 %v279, %v311
        %v313 = vsub.f32 1.0, %v312
        %v314 = vmul.f32 %v311, %v313
        %v315 = vadd.f32 %v311, %v314
        %vm316 = vweird.f32 %v279
        %vm317 = vweird.f32 %v311
        %vm318 = vmor %vm316, %vm317
        %v319 = vsel %vm318, %v311, %v315
        %v320 = vand.u32 2147483647, %v279
        %vm321 = vcmp.eq.f32.partialorder %v320, 8.507059e+37
        %v322 = vand.u32 %v279, 2147483648
        %v323 = vor.u32 1.1754944e-38, %v322
        %v324 = vsel %vm321, %v323, %v319
        %v325 = vmul.f32 %v295, %v324
        %v326 = vld [vmem:[#allocation2] sm:$0xff]
        %v327 = vadd.f32 %v290, %v291
        %v328 = vadd.f32 %v326, %v327
        %329 = vst [vmem:[#allocation2] sm:$0xff] %v328
        %s330 = scalar_lea.vmem [#allocation2], 8
        %v331 = vld [vmem:[%s330] sm:$0xff]
        %v332 = vmul.f32 %v310, %v268
        %v333 = vmul.f32 %v325, %v269
        %v334 = vadd.f32 %v332, %v333
        %v335 = vadd.f32 %v331, %v334
        %336 = vst [vmem:[%s330] sm:$0xff] %v335
        %s337 = scalar_lea.vmem [#allocation2], 16
        %v338 = vld [vmem:[%s337] sm:$0xff]
        %v339 = vmul.f32 %v310, %v310
        %v340 = vmul.f32 %v325, %v325
        %v341 = vadd.f32 %v339, %v340
        %v342 = vadd.f32 %v338, %v341
        %343 = vst [vmem:[%s337] sm:$0xff] %v342
        %s344 = scalar_lea.vmem [#allocation2], 24
        %v345 = vld [vmem:[%s344] sm:$0xff]
        %v346 = vmul.f32 %v268, %v268
        %v347 = vmul.f32 %v269, %v269
        %v348 = vadd.f32 %v346, %v347
        %v349 = vadd.f32 %v345, %v348
        %350 = vst [vmem:[%s344] sm:$0xff] %v349
        // Predicated region
        $region41: #{tpu_custom_call.1} parent=27 // pred_check
          %p351 = pneg %p244
        $region42: #{tpu_custom_call.1} parent=27 // pred_check_branch
          %353 = sbr.rel (%p351) target = $region44
        $region43: #{tpu_custom_call.1} parent=27 // pred_region
          %v354 = vld [vmem:[#allocation2] sm:$0xff]
          %v355 = vld [vmem:[#allocation2 + $0x8] sm:$0xff]
          %v356 = vld [vmem:[#allocation2 + $0x10] sm:$0xff]
          %v357 = vld [vmem:[#allocation2 + $0x18] sm:$0xff]
          %358 = vst [vmem:[%s235] sm:$0xff] %v354
          %359 = vst [vmem:[%s235 + $0x8] sm:$0xff] %v355
          %360 = vst [vmem:[%s235 + $0x10] sm:$0xff] %v356
          %361 = vst [vmem:[%s235 + $0x18] sm:$0xff] %v357
        $region44: #{tpu_custom_call.1} parent=27 // pred_fallthru
          _
        %s362 = sand.u32 %s106, 1
        %s363 = scalar_lea.sflag [#allocation5], %s362
        %s364 = sand.u32 %s106, 1
        %s365 = smul.addr %s364, 32
        %s366 = scalar_lea.vmem [#allocation8], %s365
        // Predicated region
        $region45: #{tpu_custom_call.1} parent=27 // pred_check
          %p367 = pneg %p116
        $region46: #{tpu_custom_call.1} parent=27 // pred_check_branch
          %369 = sbr.rel (%p367) target = $region48
        $region47: #{tpu_custom_call.1} parent=27 // pred_region
          %371 = vsyncadd %s363, 0
          %s372 = smul.addr %s26, 4
          %s373 = smul.addr %s372, 8
          %s374 = scalar_lea.hbm %s2, %s373
          %s375 = sshll.u32 %s366, 4
          %s376 = int_to_ptr.vmem [resolvable:$true] %s375
          %s377 = sshll.u32 %s374, 4
          %s378 = int_to_ptr.hbm [resolvable:$true] %s377
          %383 = dma.vmem_to_hbm [thread:$0]  %s376, 512, %s378, %s363, 128, 128, 8
        $region48: #{tpu_custom_call.1} parent=27 // pred_fallthru
          _
      $region28: #{tpu_custom_call.1} parent=5 // pred_fallthru
        _
      %p384 = scmp.le.s32.totalorder 2, %s17
      // Predicated region
      $region49: #{tpu_custom_call.1} parent=5 // pred_check
        %p385 = pneg %p384
      $region50: #{tpu_custom_call.1} parent=5 // pred_check_branch
        %387 = sbr.rel (%p385) target = $region52
      $region51: #{tpu_custom_call.1} parent=5 // pred_region
        %s388 = ssub.s32 %s17, 2
        // Predicated region
        $region53: #{tpu_custom_call.1} parent=51 // pred_check
          %p389 = pneg %p122
        $region54: #{tpu_custom_call.1} parent=51 // pred_check_branch
          %391 = sbr.rel (%p389) target = $region56
        $region55: #{tpu_custom_call.1} parent=51 // pred_region
          %s392 = sand.u32 %s107, 1
          %s393 = scalar_lea.sflag [#allocation5], %s392
          %s394 = sand.u32 %s107, 1
          %s395 = smul.addr %s394, 32
          %s396 = scalar_lea.vmem [#allocation8], %s395
          %398 = dma.done %s393, 512
        $region56: #{tpu_custom_call.1} parent=51 // pred_fallthru
          _
      $region52: #{tpu_custom_call.1} parent=5 // pred_fallthru
        _
    $region6: #{tpu_custom_call.1} parent=1 // loop_footer
      %s21 = sadd.s32 1, %s17
    $region7: #{tpu_custom_call.1} parent=1 // loop_footer_branch
      %16 = sbr.rel target = $region3
    $region8: #{tpu_custom_call.1} parent=1 // loop_exit
      _
    %399 = vsyncpa [#allocation4], 1
    %s400 = scalar_lea.sflag [#allocation4], 1
    %401 = vsyncpa %s400, 1
    %402 = vsyncpa [#allocation7], 1
    %s403 = scalar_lea.sflag [#allocation7], 1
    %404 = vsyncpa %s403, 1
    %405 = vsyncpa [#allocation5], 1
    %s406 = scalar_lea.sflag [#allocation5], 1
    %407 = vsyncpa %s406, 1

</llo_original>
